<compile_context>
chip_gen: v7x
topology: tpu7x:2x2x1
jax: 0.10.0
libtpu: 0.0.40
codegen_flags: <defaults>
</compile_context>

<pallas_src>
import functools

import jax
import jax.numpy as jnp
from jax.experimental import pallas as pl
from jax.experimental.pallas import tpu as pltpu

LN_EPS = 1e-5
NEG_SLOPE = 0.01      # nn.LeakyReLU default
LANES = 128           # TPU vreg lane width


def _round_up(x, m):
    return ((x + m - 1) // m) * m


def ff_layer_kernel(x_ref, w_ref, b_ref, avg_ref, o_ref):
    # One lane-dense row tile per grid step: (tile, lane) with `pack` logical
    # rows of 32 features packed side by side on the lane axis.
    x = x_ref[...].astype(jnp.float32)                       # (tile, lane)
    avg = avg_ref[...].astype(jnp.float32)                   # (lane, lane), bf16 constant

    # --- pre layer norm (centered formulation; avoids E[x^2]-mean^2 cancellation)
    # Per-32-feature-segment mean/var via a block-diagonal averaging matrix on
    # the MXU (kernel is HBM-bound; MXU has slack).
    mean = jnp.dot(x, avg, preferred_element_type=jnp.float32)
    cent = x - mean
    var = jnp.dot(cent * cent, avg, preferred_element_type=jnp.float32)
    xn = cent * jax.lax.rsqrt(var + LN_EPS)                   # EUP rsqrt (free slot)

    # --- affine: gamma/beta are folded into w/b host-side ------------------
    y = jnp.dot(xn, w_ref[...].astype(jnp.float32),
                preferred_element_type=jnp.float32)
    y = y + b_ref[...]

    # --- LeakyReLU ----------------------------------------------------------
    y = jnp.where(y >= 0, y, NEG_SLOPE * y)

    # --- dropout: eval mode / p=0.0 -> identity -----------------------------
    # TODO(synk): training-mode dropout (pltpu.prng_seed + stateful_bernoulli) not wired in.

    # --- residual connection (in_size == out_size) --------------------------
    o_ref[...] = (x + y).astype(o_ref.dtype)


def prepare_ff_constants(gamma, beta, w_t, b, *, pack=None, lanes=LANES):
    """Build the kernel constants ONCE (call at layer init, not per forward).

    gamma, beta: LayerNorm affine params, shape (d,) or (1, d).
    w_t:         nn.Linear weight pre-transposed to (in, out).
    b:           nn.Linear bias, shape (d,) or (1, d).
    pack:        logical rows packed side-by-side on the lane axis.  Default
                 lanes // d (=4 for d=32).  Optionally sweep pack=8 on v6e/v7x
                 (256x256 MXU) if profiling ever shows the MXU binding.
    """
    d_in, d_out = w_t.shape
    if d_in != d_out:
        raise ValueError("residual_connection requires in_size == out_size")
    if pack is None:
        pack = lanes // d_in if lanes % d_in == 0 else 1

    f32 = jnp.float32
    gamma = jnp.reshape(gamma, (d_in,)).astype(f32)
    beta = jnp.reshape(beta, (d_in,)).astype(f32)
    b = jnp.reshape(b, (d_out,)).astype(f32)
    w_t = w_t.astype(f32)

    # Fold the LayerNorm affine into the linear layer:
    #   (xn*gamma + beta) @ Wt + b == xn @ (diag(gamma) @ Wt) + (beta @ Wt + b)
    w_fold = gamma[:, None] * w_t
    b_fold = beta @ w_t + b

    eye = jnp.eye(pack, dtype=f32)
    # bf16 storage: default MXU precision truncates operands to bf16 anyway,
    # so this costs no accuracy and halves the resident constant footprint.
    w_bd = jnp.kron(eye, w_fold).astype(jnp.bfloat16)                       # block-diag W'
    avg = jnp.kron(eye, jnp.full((d_in, d_in), 1.0 / d_in, f32)).astype(jnp.bfloat16)
    bias = jnp.tile(b_fold[None, :], (1, pack))                              # (1, lane) f32
    return w_bd, bias, avg


@functools.partial(jax.jit, static_argnames=("tile_rows",))
def ff_layer(x, w_bd, bias, avg, *, tile_rows=4096):
    """Fused FFLayer forward.

    x:      (N, D) input rows.
    w_bd, bias, avg: constants from prepare_ff_constants().
    tile_rows: packed rows per grid step (each packed row = 128 f32 = 512 B).
               4096 ~ 2 MiB/step; sweep 4096-8192 on v5e/v6e, keep <= ~8192 on
               v7x (64 MiB physical VMEM).
    """
    N, d = x.shape
    lane = w_bd.shape[1]
    if lane % d != 0:
        raise ValueError("constant lane width must be a multiple of the feature size")
    pack = lane // d

    # Pad at most (pack-1) rows so the row-major lane-dense reshape is valid.
    # (Raggedness along the row-tile axis is handled by Pallas partial blocks.)
    n_pad = _round_up(N, pack)
    if n_pad != N:
        x = jnp.pad(x, ((0, n_pad - N), (0, 0)))
    rows = n_pad // pack
    xp = x.reshape(rows, lane)            # row-major reshape: free, no data movement

    # Tile selection: multiple of 8 sublanes, big enough to amortize per-step
    # overhead, but at least MIN_STEPS grid steps so the "parallel" row axis
    # shards across both v7x TensorCores and pipelining stays effective.
    MIN_STEPS = 8
    if rows <= 8:
        tile = rows                        # full-extent block for tiny inputs
    else:
        req = max(8, (tile_rows // 8) * 8)
        want = _round_up(pl.cdiv(rows, MIN_STEPS), 8)
        tile = min(req, want)
    grid = (pl.cdiv(rows, tile),)          # last block may be partial: rows are
                                           # independent, OOB writes are dropped.

    out_p = pl.pallas_call(
        ff_layer_kernel,
        out_shape=jax.ShapeDtypeStruct((rows, lane), x.dtype),
        grid_spec=pltpu.PrefetchScalarGridSpec(
            num_scalar_prefetch=0,
            grid=grid,
            in_specs=[
                pl.BlockSpec((tile, lane), lambda i: (i, 0)),    # packed x tile
                pl.BlockSpec((lane, lane), lambda i: (0, 0)),    # block-diag folded W (bf16)
                pl.BlockSpec((1, lane), lambda i: (0, 0)),       # folded bias (f32)
                pl.BlockSpec((lane, lane), lambda i: (0, 0)),    # block-diag mean matrix (bf16)
            ],
            out_specs=pl.BlockSpec((tile, lane), lambda i: (i, 0)),
        ),
        compiler_params=pltpu.CompilerParams(
            # Row tiles are independent -> shard across TensorCores (v7x megacore).
            dimension_semantics=("parallel",),
            # Headroom for tile sweeps; v5e scoped default is only 16 MiB.
            vmem_limit_bytes=32 * 1024 * 1024,
        ),
    )(xp, w_bd, bias, avg)

    out = out_p.reshape(n_pad, d)
    return out[:N] if n_pad != N else out


def ff_layer_ref(x, gamma, beta, w_t, b):
    """Pure-JAX reference mirroring the PyTorch forward pass (eval mode)."""
    xf = x.astype(jnp.float32)
    mean = jnp.mean(xf, axis=-1, keepdims=True)
    var = jnp.mean((xf - mean) ** 2, axis=-1, keepdims=True)
    xn = (xf - mean) * jax.lax.rsqrt(var + LN_EPS) * gamma + beta
    y = xn @ w_t + b
    y = jnp.where(y >= 0, y, NEG_SLOPE * y)
    return (xf + y).astype(x.dtype)


if __name__ == "__main__":
    D = 32  # residual requires in_size == out_size

    key = jax.random.PRNGKey(0)
    kx1, kx2, kw, kb, kg, kbt = jax.random.split(key, 6)

    # Deterministic synthetic parameters (shapes match nn.Linear / nn.LayerNorm).
    bound = 1.0 / (D ** 0.5)
    w = jax.random.uniform(kw, (D, D), minval=-bound, maxval=bound,
                           dtype=jnp.float32)                 # nn.Linear weight (out, in)
    b = jax.random.uniform(kb, (1, D), minval=-bound, maxval=bound,
                           dtype=jnp.float32)                 # nn.Linear bias
    gamma = 1.0 + 0.1 * jax.random.normal(kg, (1, D), dtype=jnp.float32)
    beta = 0.1 * jax.random.normal(kbt, (1, D), dtype=jnp.float32)
    w_t = w.T                                                  # (in, out) for x @ W^T

    # Constants built ONCE (hoisted out of the per-call path).
    w_bd, bias_c, avg_c = prepare_ff_constants(gamma, beta, w_t, b)

    # Tolerance covers the default bf16 MXU matmul precision (both in the
    # kernel and the XLA reference dots); with matched precision the error is
    # ~1e-6, so the slack is for the precision policy, not the formulation.
    TOL = 3e-2

    # Case 1: small input, default tile_rows -> multi-step grid (rows=16, tile=8).
    x1 = jax.random.normal(kx1, (64, D), dtype=jnp.float32)
    out1 = jax.block_until_ready(ff_layer(x1, w_bd, bias_c, avg_c, tile_rows=4096))
    ref1 = ff_layer_ref(x1, gamma, beta, w_t, b)
    assert out1.shape == x1.shape
    assert float(jnp.max(jnp.abs(out1 - ref1))) < TOL, "case1 mismatch vs reference"

    # Case 2: N not a multiple of pack (tiny pad) and rows not a multiple of the
    # tile -> exercises the Pallas partial-final-block path (grid of 16 steps).
    x2 = jax.random.normal(kx2, (999, D), dtype=jnp.float32)
    out2 = jax.block_until_ready(ff_layer(x2, w_bd, bias_c, avg_c, tile_rows=16))
    ref2 = ff_layer_ref(x2, gamma, beta, w_t, b)
    assert out2.shape == x2.shape
    assert float(jnp.max(jnp.abs(out2 - ref2))) < TOL, "case2 mismatch vs reference"

    print("KERNEL_OK")
</pallas_src>

<mosaic_0001>
module attributes {stable_mosaic.version = 11 : i64} {
  func.func @ff_layer_kernel(%arg0: i32, %arg1: memref<8x128xf32, #tpu.memory_space<vmem>>, %arg2: memref<128x128xbf16, #tpu.memory_space<vmem>>, %arg3: memref<1x128xf32, #tpu.memory_space<vmem>>, %arg4: memref<128x128xbf16, #tpu.memory_space<vmem>>, %arg5: memref<8x128xf32, #tpu.memory_space<vmem>>) attributes {dimension_semantics = [#tpu.dimension_semantics<parallel>], iteration_bounds = array<i64: 2>, scalar_prefetch = 0 : i64, scratch_operands = 0 : i64, tpu.core_type = #tpu.core_type<tc>, window_params = [{transform_indices = @transform_0, window_bounds = array<i64: 8, 128>}, {pipeline_mode = #tpu.pipeline_mode<synchronous>, transform_indices = @transform_1, window_bounds = array<i64: 128, 128>}, {pipeline_mode = #tpu.pipeline_mode<synchronous>, transform_indices = @transform_2, window_bounds = array<i64: 1, 128>}, {pipeline_mode = #tpu.pipeline_mode<synchronous>, transform_indices = @transform_3, window_bounds = array<i64: 128, 128>}, {transform_indices = @transform_4, window_bounds = array<i64: 8, 128>}]} {
    %c0 = arith.constant 0 : index
    %c0_0 = arith.constant 0 : index
    %0 = vector.load %arg1[%c0, %c0_0] : memref<8x128xf32, #tpu.memory_space<vmem>>, vector<8x128xf32>
    %c0_1 = arith.constant 0 : index
    %c0_2 = arith.constant 0 : index
    %1 = vector.load %arg4[%c0_1, %c0_2] : memref<128x128xbf16, #tpu.memory_space<vmem>>, vector<128x128xbf16>
    %2 = arith.extf %1 : vector<128x128xbf16> to vector<128x128xf32>
    %cst = arith.constant dense<0.000000e+00> : vector<8x128xf32>
    %3 = tpu.matmul %0, %2, %cst {dimension_numbers = #tpu.dot_dimension_numbers<[1], [0], [0], [1], [0, 0, 1, 1], [], []>} : vector<8x128xf32>, vector<128x128xf32>, vector<8x128xf32> -> vector<8x128xf32>
    %4 = arith.subf %0, %3 : vector<8x128xf32>
    %5 = arith.mulf %4, %4 : vector<8x128xf32>
    %cst_3 = arith.constant dense<0.000000e+00> : vector<8x128xf32>
    %6 = tpu.matmul %5, %2, %cst_3 {dimension_numbers = #tpu.dot_dimension_numbers<[1], [0], [0], [1], [0, 0, 1, 1], [], []>} : vector<8x128xf32>, vector<128x128xf32>, vector<8x128xf32> -> vector<8x128xf32>
    %cst_4 = arith.constant 9.99999974E-6 : f32
    %7 = vector.broadcast %cst_4 : f32 to vector<8x128xf32>
    %8 = arith.addf %6, %7 : vector<8x128xf32>
    %9 = math.rsqrt %8 : vector<8x128xf32>
    %10 = arith.mulf %4, %9 : vector<8x128xf32>
    %c0_5 = arith.constant 0 : index
    %c0_6 = arith.constant 0 : index
    %11 = vector.load %arg2[%c0_5, %c0_6] : memref<128x128xbf16, #tpu.memory_space<vmem>>, vector<128x128xbf16>
    %12 = arith.extf %11 : vector<128x128xbf16> to vector<128x128xf32>
    %cst_7 = arith.constant dense<0.000000e+00> : vector<8x128xf32>
    %13 = tpu.matmul %10, %12, %cst_7 {dimension_numbers = #tpu.dot_dimension_numbers<[1], [0], [0], [1], [0, 0, 1, 1], [], []>} : vector<8x128xf32>, vector<128x128xf32>, vector<8x128xf32> -> vector<8x128xf32>
    %c0_8 = arith.constant 0 : index
    %c0_9 = arith.constant 0 : index
    %14 = vector.load %arg3[%c0_8, %c0_9] : memref<1x128xf32, #tpu.memory_space<vmem>>, vector<1x128xf32>
    %15 = vector.broadcast %14 : vector<1x128xf32> to vector<8x128xf32>
    %16 = arith.addf %13, %15 : vector<8x128xf32>
    %cst_10 = arith.constant 0.000000e+00 : f32
    %17 = vector.broadcast %cst_10 : f32 to vector<8x128xf32>
    %18 = arith.cmpf oge, %16, %17 : vector<8x128xf32>
    %cst_11 = arith.constant 0.00999999977 : f32
    %19 = vector.broadcast %cst_11 : f32 to vector<8x128xf32>
    %20 = arith.mulf %19, %16 : vector<8x128xf32>
    %21 = arith.select %18, %16, %20 : vector<8x128xi1>, vector<8x128xf32>
    %22 = arith.addf %0, %21 : vector<8x128xf32>
    %c0_12 = arith.constant 0 : index
    %c0_13 = arith.constant 0 : index
    %23 = vector.load %arg5[%c0_12, %c0_13] : memref<8x128xf32, #tpu.memory_space<vmem>>, vector<8x128xf32>
    tpu.vector_store %arg5[%c0_12, %c0_13], %22 {strides = array<i32>} : memref<8x128xf32, #tpu.memory_space<vmem>>, vector<8x128xf32>,
    return
  }
  func.func @transform_0(%arg0: i32) -> (i32, i32) {
    %c0_i32 = arith.constant 0 : i32
    %c0_i32_0 = arith.constant 0 : i32
    return %arg0, %c0_i32 : i32, i32
  }
  func.func @transform_1(%arg0: i32) -> (i32, i32) {
    %c0_i32 = arith.constant 0 : i32
    %c0_i32_0 = arith.constant 0 : i32
    %c0_i32_1 = arith.constant 0 : i32
    return %c0_i32, %c0_i32_0 : i32, i32
  }
  func.func @transform_2(%arg0: i32) -> (i32, i32) {
    %c0_i32 = arith.constant 0 : i32
    %c0_i32_0 = arith.constant 0 : i32
    %c0_i32_1 = arith.constant 0 : i32
    return %c0_i32, %c0_i32_0 : i32, i32
  }
  func.func @transform_3(%arg0: i32) -> (i32, i32) {
    %c0_i32 = arith.constant 0 : i32
    %c0_i32_0 = arith.constant 0 : i32
    %c0_i32_1 = arith.constant 0 : i32
    return %c0_i32, %c0_i32_0 : i32, i32
  }
  func.func @transform_4(%arg0: i32) -> (i32, i32) {
    %c0_i32 = arith.constant 0 : i32
    %c0_i32_0 = arith.constant 0 : i32
    return %arg0, %c0_i32 : i32, i32
  }
}

</mosaic_0001>

<llo_original>
// kernel: ff_layer.1
$region0: #{ff_layer.1}
  #allocation0 [shape = 'u32[]', space=smem, size = 0x4, offset = 0x4, fixed_abs, tag = 'smem constant byte address 0x4 - core index']
  #allocation1 [shape = 'u32[144,128]{1,0:T(1,128)}', space=vmem, size = 0x12000, scoped, tag = 'internal scratch']
  %s0 = inlined_call_operand.vmem [shape: f32[16,128], index: 0, kind: input, shape index: {}]
  %s1 = inlined_call_operand.vmem [shape: bf16[128,128], index: 1, kind: input, shape index: {}]
  %s2 = inlined_call_operand.vmem [shape: f32[1,128], index: 2, kind: input, shape index: {}]
  %s3 = inlined_call_operand.vmem [shape: bf16[128,128], index: 3, kind: input, shape index: {}]
  %s4 = inlined_call_operand.vmem [shape: f32[16,128], index: 4, kind: output, shape index: {}]
  %s5 = sld [smem:[#allocation0]]
  $region49: #{ff_layer.1} parent=0
    _
  %s7 = ssub.s32 1, %s5
  %s8 = scalar_select 0, %s7, %s5
  loop: start=0, step=1, limit=4
  $region2: #{ff_layer.1} parent=0 // loop_pre_header
    _
  $region3: #{ff_layer.1} parent=0 // loop_header
    %s10 = sphi 0, %s14
    %p11 = scmp.ge.s32.totalorder %s10, 4
    %s20 = sphi 0, %s22
    %s23 = sphi 0, %s20
    %s24 = sphi 0, %s23
    %s40 = sphi 0, %s24
    %s44 = sphi 0, %s44
    %s46 = sphi 0, %s44
    %s47 = sphi 0, %s46
    %s61 = sphi 0, %s47
    %s65 = sphi 0, %s65
    %s67 = sphi 0, %s65
    %s68 = sphi 0, %s67
    %s82 = sphi 0, %s68
    %s86 = sphi 0, %s86
    %s88 = sphi 0, %s86
    %s89 = sphi 0, %s88
    %s103 = sphi 0, %s89
    %s109 = sphi 0, %s111
    %s112 = sphi 0, %s109
    %s113 = sphi 0, %s112
    %s129 = sphi 0, %s113
  $region4: #{ff_layer.1} parent=0 // loop_header_branch
    %13 = sbr.rel (%p11) target = $region8
  $region5: #{ff_layer.1} parent=0 // loop_body
    %s15 = ssub.s32 %s10, 1
    %s16 = ssub.s32 %s10, 2
    %s17 = sadd.s32 %s10, 1
    %s18 = ssub.s32 %s10, %s17
    %p19 = scmp.eq.s32.totalorder %s18, 0
    %s21 = sadd.s32 %s20, 1
    %s22 = scalar_select %p19, %s20, %s21
    %p25 = pneg %p19
    %p26 = scmp.eq.s32.totalorder %s10, 1
    %p27 = por %p25, %p26
    %p28 = scmp.ne.s32.totalorder %s20, %s23
    %p29 = scmp.eq.s32.totalorder %s10, 0
    %p30 = por %p28, %p29
    %p31 = scmp.ne.s32.totalorder %s20, %s23
    %p32 = scmp.eq.s32.totalorder %s15, 1
    %p33 = por %p31, %p32
    %p34 = scmp.ne.s32.totalorder %s23, %s24
    %p35 = scmp.eq.s32.totalorder %s15, 0
    %p36 = por %p34, %p35
    %p37 = scmp.ne.s32.totalorder %s23, %s24
    %p38 = scmp.eq.s32.totalorder %s16, 1
    %p39 = por %p37, %p38
    %p41 = scmp.ne.s32.totalorder %s24, %s40
    %p42 = scmp.eq.s32.totalorder %s16, 0
    %p43 = por %p41, %p42
    %s45 = sadd.s32 %s44, 1
    %p48 = scmp.eq.s32.totalorder %s10, 1
    %p49 = scmp.ne.s32.totalorder %s44, %s46
    %p50 = scmp.eq.s32.totalorder %s10, 0
    %p51 = por %p49, %p50
    %p52 = scmp.ne.s32.totalorder %s44, %s46
    %p53 = scmp.eq.s32.totalorder %s15, 1
    %p54 = por %p52, %p53
    %p55 = scmp.ne.s32.totalorder %s46, %s47
    %p56 = scmp.eq.s32.totalorder %s15, 0
    %p57 = por %p55, %p56
    %p58 = scmp.ne.s32.totalorder %s46, %s47
    %p59 = scmp.eq.s32.totalorder %s16, 1
    %p60 = por %p58, %p59
    %p62 = scmp.ne.s32.totalorder %s47, %s61
    %p63 = scmp.eq.s32.totalorder %s16, 0
    %p64 = por %p62, %p63
    %s66 = sadd.s32 %s65, 1
    %p69 = scmp.eq.s32.totalorder %s10, 1
    %p70 = scmp.ne.s32.totalorder %s65, %s67
    %p71 = scmp.eq.s32.totalorder %s10, 0
    %p72 = por %p70, %p71
    %p73 = scmp.ne.s32.totalorder %s65, %s67
    %p74 = scmp.eq.s32.totalorder %s15, 1
    %p75 = por %p73, %p74
    %p76 = scmp.ne.s32.totalorder %s67, %s68
    %p77 = scmp.eq.s32.totalorder %s15, 0
    %p78 = por %p76, %p77
    %p79 = scmp.ne.s32.totalorder %s67, %s68
    %p80 = scmp.eq.s32.totalorder %s16, 1
    %p81 = por %p79, %p80
    %p83 = scmp.ne.s32.totalorder %s68, %s82
    %p84 = scmp.eq.s32.totalorder %s16, 0
    %p85 = por %p83, %p84
    %s87 = sadd.s32 %s86, 1
    %p90 = scmp.eq.s32.totalorder %s10, 1
    %p91 = scmp.ne.s32.totalorder %s86, %s88
    %p92 = scmp.eq.s32.totalorder %s10, 0
    %p93 = por %p91, %p92
    %p94 = scmp.ne.s32.totalorder %s86, %s88
    %p95 = scmp.eq.s32.totalorder %s15, 1
    %p96 = por %p94, %p95
    %p97 = scmp.ne.s32.totalorder %s88, %s89
    %p98 = scmp.eq.s32.totalorder %s15, 0
    %p99 = por %p97, %p98
    %p100 = scmp.ne.s32.totalorder %s88, %s89
    %p101 = scmp.eq.s32.totalorder %s16, 1
    %p102 = por %p100, %p101
    %p104 = scmp.ne.s32.totalorder %s89, %s103
    %p105 = scmp.eq.s32.totalorder %s16, 0
    %p106 = por %p104, %p105
    %s107 = ssub.s32 %s10, %s17
    %p108 = scmp.eq.s32.totalorder %s107, 0
    %s110 = sadd.s32 %s109, 1
    %s111 = scalar_select %p108, %s109, %s110
    %p114 = pneg %p108
    %p115 = scmp.eq.s32.totalorder %s10, 1
    %p116 = por %p114, %p115
    %p117 = scmp.ne.s32.totalorder %s109, %s112
    %p118 = scmp.eq.s32.totalorder %s10, 0
    %p119 = por %p117, %p118
    %p120 = scmp.ne.s32.totalorder %s109, %s112
    %p121 = scmp.eq.s32.totalorder %s15, 1
    %p122 = por %p120, %p121
    %p123 = scmp.ne.s32.totalorder %s112, %s113
    %p124 = scmp.eq.s32.totalorder %s15, 0
    %p125 = por %p123, %p124
    %p126 = scmp.ne.s32.totalorder %s112, %s113
    %p127 = scmp.eq.s32.totalorder %s16, 1
    %p128 = por %p126, %p127
    %p130 = scmp.ne.s32.totalorder %s113, %s129
    %p131 = scmp.eq.s32.totalorder %s16, 0
    %p132 = por %p130, %p131
    %p133 = scmp.le.s32.totalorder 1, %s10
    %p134 = scmp.lt.s32.totalorder %s10, 3
    %p135 = pnand %p133, %p134
    %p136 = pneg %p135
    // Predicated region
    $region9: #{ff_layer.1} parent=5 // pred_check
      _
    $region10: #{ff_layer.1} parent=5 // pred_check_branch
      %138 = sbr.rel (%p135) target = $region12
    $region11: #{ff_layer.1} parent=5 // pred_region
      %s139 = ssub.s32 %s10, 1
      // Predicated region
      $region13: #{ff_layer.1} parent=11 // pred_check
        %p140 = pneg %p57
      $region14: #{ff_layer.1} parent=11 // pred_check_branch
        %142 = sbr.rel (%p140) target = $region16
      $region15: #{ff_layer.1} parent=11 // pred_region
        _
      $region16: #{ff_layer.1} parent=11 // pred_fallthru
        _
      // Predicated region
      $region17: #{ff_layer.1} parent=11 // pred_check
        %p143 = pneg %p78
      $region18: #{ff_layer.1} parent=11 // pred_check_branch
        %145 = sbr.rel (%p143) target = $region20
      $region19: #{ff_layer.1} parent=11 // pred_region
        _
      $region20: #{ff_layer.1} parent=11 // pred_fallthru
        _
      // Predicated region
      $region21: #{ff_layer.1} parent=11 // pred_check
        %p146 = pneg %p99
      $region22: #{ff_layer.1} parent=11 // pred_check_branch
        %148 = sbr.rel (%p146) target = $region24
      $region23: #{ff_layer.1} parent=11 // pred_region
        _
      $region24: #{ff_layer.1} parent=11 // pred_fallthru
        _
    $region12: #{ff_layer.1} parent=5 // pred_fallthru
      _
    %p149 = scmp.lt.s32.totalorder %s10, 2
    // Predicated region
    $region25: #{ff_layer.1} parent=5 // pred_check
      %p150 = pneg %p149
    $region26: #{ff_layer.1} parent=5 // pred_check_branch
      %152 = sbr.rel (%p150) target = $region28
    $region27: #{ff_layer.1} parent=5 // pred_region
      // Predicated region
      $region29: #{ff_layer.1} parent=27 // pred_check
        %p153 = pneg %p30
      $region30: #{ff_layer.1} parent=27 // pred_check_branch
        %155 = sbr.rel (%p153) target = $region32
      $region31: #{ff_layer.1} parent=27 // pred_region
        %p156 = scmp.lt.s32.totalorder %s10, 1
        %s157 = scalar_select %p156, %s10, 1
        %s158 = smul.addr %s157, 8
        %s159 = scalar_lea.vmem %s0, %s158
      $region32: #{ff_layer.1} parent=27 // pred_fallthru
        _
    $region28: #{ff_layer.1} parent=5 // pred_fallthru
      _
    %p160 = scmp.le.s32.totalorder 1, %s10
    %p161 = scmp.lt.s32.totalorder %s10, 3
    %p162 = pnand %p160, %p161
    %p163 = pneg %p162
    // Predicated region
    $region33: #{ff_layer.1} parent=5 // pred_check
      _
    $region34: #{ff_layer.1} parent=5 // pred_check_branch
      %165 = sbr.rel (%p162) target = $region36
    $region35: #{ff_layer.1} parent=5 // pred_region
      %s166 = ssub.s32 %s10, 1
      %p167 = scmp.lt.s32.totalorder %s15, 1
      %s168 = scalar_select %p167, %s15, 1
      %s169 = smul.addr %s168, 8
      %s170 = scalar_lea.vmem %s0, %s169
      %p171 = pneg %p36
      %p172 = pneg %p33
      %p173 = pneg %p57
      %p174 = pneg %p54
      %p175 = pneg %p78
      %p176 = pneg %p75
      %p177 = pneg %p99
      %p178 = pneg %p96
      %p179 = pneg %p125
      %p180 = pneg %p122
      %p181 = scmp.lt.s32.totalorder %s15, 1
      %s182 = scalar_select %p181, %s15, 1
      %s183 = smul.addr %s182, 8
      %s184 = scalar_lea.vmem %s4, %s183
      %p185 = scmp.lt.s32.totalorder %s15, 1
      %s186 = scalar_select %p185, %s15, 1
      %s187 = smul.addr %s186, 8
      %s188 = scalar_lea.vmem %s0, %s187
      %p189 = scmp.lt.s32.totalorder %s15, 1
      %s190 = scalar_select %p189, %s15, 1
      %s191 = smul.addr %s190, 8
      %s192 = scalar_lea.vmem %s4, %s191
      %v193 = vld [vmem:[%s188] sm:$0xff]
      %v194 = vld [vmem:[%s3] sm:$0xf]
      %v195 = vld [vmem:[%s3 + $0x4] sm:$0xf]
      %v196 = vld [vmem:[%s3 + $0x8] sm:$0xf]
      %v197 = vld [vmem:[%s3 + $0xc] sm:$0xf]
      %v198 = vld [vmem:[%s3 + $0x10] sm:$0xf]
      %v199 = vld [vmem:[%s3 + $0x14] sm:$0xf]
      %v200 = vld [vmem:[%s3 + $0x18] sm:$0xf]
      %v201 = vld [vmem:[%s3 + $0x1c] sm:$0xf]
      %v202 = vld [vmem:[%s3 + $0x20] sm:$0xf]
      %v203 = vld [vmem:[%s3 + $0x24] sm:$0xf]
      %v204 = vld [vmem:[%s3 + $0x28] sm:$0xf]
      %v205 = vld [vmem:[%s3 + $0x2c] sm:$0xf]
      %v206 = vld [vmem:[%s3 + $0x30] sm:$0xf]
      %v207 = vld [vmem:[%s3 + $0x34] sm:$0xf]
      %v208 = vld [vmem:[%s3 + $0x38] sm:$0xf]
      %v209 = vld [vmem:[%s3 + $0x3c] sm:$0xf]
      %v210 = vunpack.c.l.bf16 %v194
      %v211 = vunpack.c.l.bf16 %v195
      %v212 = vunpack.c.l.bf16 %v196
      %v213 = vunpack.c.l.bf16 %v197
      %v214 = vunpack.c.l.bf16 %v198
      %v215 = vunpack.c.l.bf16 %v199
      %v216 = vunpack.c.l.bf16 %v200
      %v217 = vunpack.c.l.bf16 %v201
      %v218 = vunpack.c.l.bf16 %v202
      %v219 = vunpack.c.l.bf16 %v203
      %v220 = vunpack.c.l.bf16 %v204
      %v221 = vunpack.c.l.bf16 %v205
      %v222 = vunpack.c.l.bf16 %v206
      %v223 = vunpack.c.l.bf16 %v207
      %v224 = vunpack.c.l.bf16 %v208
      %v225 = vunpack.c.l.bf16 %v209
      %226 = vmatprep.subr.mxu0 0.0
      %227 = vmatpush1.msra.mxu0 %v210
      %228 = vmatprep.subr.mxu0 0.0
      %229 = vmatpush1.msra.mxu0 %v211
      %230 = vmatprep.subr.mxu0 0.0
      %231 = vmatpush1.msra.mxu0 %v212
      %232 = vmatprep.subr.mxu0 0.0
      %233 = vmatpush1.msra.mxu0 %v213
      %234 = vmatprep.subr.mxu0 0.0
      %235 = vmatpush1.msra.mxu0 %v214
      %236 = vmatprep.subr.mxu0 0.0
      %237 = vmatpush1.msra.mxu0 %v215
      %238 = vmatprep.subr.mxu0 0.0
      %239 = vmatpush1.msra.mxu0 %v216
      %240 = vmatprep.subr.mxu0 0.0
      %241 = vmatpush1.msra.mxu0 %v217
      %242 = vmatprep.subr.mxu0 0.0
      %243 = vmatpush1.msra.mxu0 %v218
      %244 = vmatprep.subr.mxu0 0.0
      %245 = vmatpush1.msra.mxu0 %v219
      %246 = vmatprep.subr.mxu0 0.0
      %247 = vmatpush1.msra.mxu0 %v220
      %248 = vmatprep.subr.mxu0 0.0
      %249 = vmatpush1.msra.mxu0 %v221
      %250 = vmatprep.subr.mxu0 0.0
      %251 = vmatpush1.msra.mxu0 %v222
      %252 = vmatprep.subr.mxu0 0.0
      %253 = vmatpush1.msra.mxu0 %v223
      %254 = vmatprep.subr.mxu0 0.0
      %255 = vmatpush1.msra.mxu0 %v224
      %256 = vmatprep.subr.mxu0 0.0
      %257 = vmatpush1.msra.mxu0 %v225
      %258 = vmatprep.subr.mxu0 0.0
      %259 = vmatpush1.msra.mxu0 0.0
      %260 = vmatprep.subr.mxu0 0.0
      %261 = vmatpush1.msra.mxu0 0.0
      %262 = vmatprep.subr.mxu0 0.0
      %263 = vmatpush1.msra.mxu0 0.0
      %264 = vmatprep.subr.mxu0 0.0
      %265 = vmatpush1.msra.mxu0 0.0
      %266 = vmatprep.subr.mxu0 0.0
      %267 = vmatpush1.msra.mxu0 0.0
      %268 = vmatprep.subr.mxu0 0.0
      %269 = vmatpush1.msra.mxu0 0.0
      %270 = vmatprep.subr.mxu0 0.0
      %271 = vmatpush1.msra.mxu0 0.0
      %272 = vmatprep.subr.mxu0 0.0
      %273 = vmatpush1.msra.mxu0 0.0
      %274 = vmatprep.subr.mxu0 0.0
      %275 = vmatpush1.msra.mxu0 0.0
      %276 = vmatprep.subr.mxu0 0.0
      %277 = vmatpush1.msra.mxu0 0.0
      %278 = vmatprep.subr.mxu0 0.0
      %279 = vmatpush1.msra.mxu0 0.0
      %280 = vmatprep.subr.mxu0 0.0
      %281 = vmatpush1.msra.mxu0 0.0
      %282 = vmatprep.subr.mxu0 0.0
      %283 = vmatpush1.msra.mxu0 0.0
      %284 = vmatprep.subr.mxu0 0.0
      %285 = vmatpush1.msra.mxu0 0.0
      %286 = vmatprep.subr.mxu0 0.0
      %287 = vmatpush1.msra.mxu0 0.0
      %288 = vmatprep.subr.mxu0 0.0
      %289 = vmatpush1.msra.mxu0 0.0
      %290 = vmatprep.mubr.f32.mxu0 0.0
      %291 = vmatmul.mubr.f32.gmra.mrb[0].mxu0 %v193
      %v292 = vpop.f32.mrb[0].mxu0
      %v293 = vadd.f32 0.0, %v292
      %v294 = vpop.f32.mrb[0].mxu0
      %295 = vdwg.mxu0
      %v296 = vsub.f32 %v193, %v293
      %v297 = vmul.f32 %v296, %v296
      %298 = vmatprep.subr.mxu0 0.0
      %299 = vmatpush1.msra.mxu0 %v210
      %300 = vmatprep.subr.mxu0 0.0
      %301 = vmatpush1.msra.mxu0 %v211
      %302 = vmatprep.subr.mxu0 0.0
      %303 = vmatpush1.msra.mxu0 %v212
      %304 = vmatprep.subr.mxu0 0.0
      %305 = vmatpush1.msra.mxu0 %v213
      %306 = vmatprep.subr.mxu0 0.0
      %307 = vmatpush1.msra.mxu0 %v214
      %308 = vmatprep.subr.mxu0 0.0
      %309 = vmatpush1.msra.mxu0 %v215
      %310 = vmatprep.subr.mxu0 0.0
      %311 = vmatpush1.msra.mxu0 %v216
      %312 = vmatprep.subr.mxu0 0.0
      %313 = vmatpush1.msra.mxu0 %v217
      %314 = vmatprep.subr.mxu0 0.0
      %315 = vmatpush1.msra.mxu0 %v218
      %316 = vmatprep.subr.mxu0 0.0
      %317 = vmatpush1.msra.mxu0 %v219
      %318 = vmatprep.subr.mxu0 0.0
      %319 = vmatpush1.msra.mxu0 %v220
      %320 = vmatprep.subr.mxu0 0.0
      %321 = vmatpush1.msra.mxu0 %v221
      %322 = vmatprep.subr.mxu0 0.0
      %323 = vmatpush1.msra.mxu0 %v222
      %324 = vmatprep.subr.mxu0 0.0
      %325 = vmatpush1.msra.mxu0 %v223
      %326 = vmatprep.subr.mxu0 0.0
      %327 = vmatpush1.msra.mxu0 %v224
      %328 = vmatprep.subr.mxu0 0.0
      %329 = vmatpush1.msra.mxu0 %v225
      %330 = vmatprep.subr.mxu0 0.0
      %331 = vmatpush1.msra.mxu0 0.0
      %332 = vmatprep.subr.mxu0 0.0
      %333 = vmatpush1.msra.mxu0 0.0
      %334 = vmatprep.subr.mxu0 0.0
      %335 = vmatpush1.msra.mxu0 0.0
      %336 = vmatprep.subr.mxu0 0.0
      %337 = vmatpush1.msra.mxu0 0.0
      %338 = vmatprep.subr.mxu0 0.0
      %339 = vmatpush1.msra.mxu0 0.0
      %340 = vmatprep.subr.mxu0 0.0
      %341 = vmatpush1.msra.mxu0 0.0
      %342 = vmatprep.subr.mxu0 0.0
      %343 = vmatpush1.msra.mxu0 0.0
      %344 = vmatprep.subr.mxu0 0.0
      %345 = vmatpush1.msra.mxu0 0.0
      %346 = vmatprep.subr.mxu0 0.0
      %347 = vmatpush1.msra.mxu0 0.0
      %348 = vmatprep.subr.mxu0 0.0
      %349 = vmatpush1.msra.mxu0 0.0
      %350 = vmatprep.subr.mxu0 0.0
      %351 = vmatpush1.msra.mxu0 0.0
      %352 = vmatprep.subr.mxu0 0.0
      %353 = vmatpush1.msra.mxu0 0.0
      %354 = vmatprep.subr.mxu0 0.0
      %355 = vmatpush1.msra.mxu0 0.0
      %356 = vmatprep.subr.mxu0 0.0
      %357 = vmatpush1.msra.mxu0 0.0
      %358 = vmatprep.subr.mxu0 0.0
      %359 = vmatpush1.msra.mxu0 0.0
      %360 = vmatprep.subr.mxu0 0.0
      %361 = vmatpush1.msra.mxu0 0.0
      %362 = vmatprep.mubr.f32.mxu0 0.0
      %363 = vmatmul.mubr.f32.gmra.mrb[0].mxu0 %v297
      %v364 = vpop.f32.mrb[0].mxu0
      %v365 = vadd.f32 1e-05, %v364
      %v366 = vpop.f32.mrb[0].mxu0
      %367 = vdwg.mxu0
      %v368 = vrsqrt.pop %v365
      %v369 = vmul.f32 %v296, %v368
      %v370 = vld [vmem:[%s1] sm:$0xf]
      %v371 = vld [vmem:[%s1 + $0x4] sm:$0xf]
      %v372 = vld [vmem:[%s1 + $0x8] sm:$0xf]
      %v373 = vld [vmem:[%s1 + $0xc] sm:$0xf]
      %v374 = vld [vmem:[%s1 + $0x10] sm:$0xf]
      %v375 = vld [vmem:[%s1 + $0x14] sm:$0xf]
      %v376 = vld [vmem:[%s1 + $0x18] sm:$0xf]
      %v377 = vld [vmem:[%s1 + $0x1c] sm:$0xf]
      %v378 = vld [vmem:[%s1 + $0x20] sm:$0xf]
      %v379 = vld [vmem:[%s1 + $0x24] sm:$0xf]
      %v380 = vld [vmem:[%s1 + $0x28] sm:$0xf]
      %v381 = vld [vmem:[%s1 + $0x2c] sm:$0xf]
      %v382 = vld [vmem:[%s1 + $0x30] sm:$0xf]
      %v383 = vld [vmem:[%s1 + $0x34] sm:$0xf]
      %v384 = vld [vmem:[%s1 + $0x38] sm:$0xf]
      %v385 = vld [vmem:[%s1 + $0x3c] sm:$0xf]
      %v386 = vunpack.c.l.bf16 %v370
      %v387 = vunpack.c.l.bf16 %v371
      %v388 = vunpack.c.l.bf16 %v372
      %v389 = vunpack.c.l.bf16 %v373
      %v390 = vunpack.c.l.bf16 %v374
      %v391 = vunpack.c.l.bf16 %v375
      %v392 = vunpack.c.l.bf16 %v376
      %v393 = vunpack.c.l.bf16 %v377
      %v394 = vunpack.c.l.bf16 %v378
      %v395 = vunpack.c.l.bf16 %v379
      %v396 = vunpack.c.l.bf16 %v380
      %v397 = vunpack.c.l.bf16 %v381
      %v398 = vunpack.c.l.bf16 %v382
      %v399 = vunpack.c.l.bf16 %v383
      %v400 = vunpack.c.l.bf16 %v384
      %v401 = vunpack.c.l.bf16 %v385
      %v402 = vld [vmem:[%s2] sm:$0x1]
      %v404 = vlaneseq
      %v405 = vshrl.u32 %v404, 7
      %v406 = vsub.s32 0, %v405
      %v407 = vrot.slane %v402, %v406
      %409 = vmatprep.subr.mxu0 0.0
      %410 = vmatpush1.msra.mxu0 %v386
      %411 = vmatprep.subr.mxu0 0.0
      %412 = vmatpush1.msra.mxu0 %v387
      %413 = vmatprep.subr.mxu0 0.0
      %414 = vmatpush1.msra.mxu0 %v388
      %415 = vmatprep.subr.mxu0 0.0
      %416 = vmatpush1.msra.mxu0 %v389
      %417 = vmatprep.subr.mxu0 0.0
      %418 = vmatpush1.msra.mxu0 %v390
      %419 = vmatprep.subr.mxu0 0.0
      %420 = vmatpush1.msra.mxu0 %v391
      %421 = vmatprep.subr.mxu0 0.0
      %422 = vmatpush1.msra.mxu0 %v392
      %423 = vmatprep.subr.mxu0 0.0
      %424 = vmatpush1.msra.mxu0 %v393
      %425 = vmatprep.subr.mxu0 0.0
      %426 = vmatpush1.msra.mxu0 %v394
      %427 = vmatprep.subr.mxu0 0.0
      %428 = vmatpush1.msra.mxu0 %v395
      %429 = vmatprep.subr.mxu0 0.0
      %430 = vmatpush1.msra.mxu0 %v396
      %431 = vmatprep.subr.mxu0 0.0
      %432 = vmatpush1.msra.mxu0 %v397
      %433 = vmatprep.subr.mxu0 0.0
      %434 = vmatpush1.msra.mxu0 %v398
      %435 = vmatprep.subr.mxu0 0.0
      %436 = vmatpush1.msra.mxu0 %v399
      %437 = vmatprep.subr.mxu0 0.0
      %438 = vmatpush1.msra.mxu0 %v400
      %439 = vmatprep.subr.mxu0 0.0
      %440 = vmatpush1.msra.mxu0 %v401
      %441 = vmatprep.subr.mxu0 0.0
      %442 = vmatpush1.msra.mxu0 0.0
      %443 = vmatprep.subr.mxu0 0.0
      %444 = vmatpush1.msra.mxu0 0.0
      %445 = vmatprep.subr.mxu0 0.0
      %446 = vmatpush1.msra.mxu0 0.0
      %447 = vmatprep.subr.mxu0 0.0
      %448 = vmatpush1.msra.mxu0 0.0
      %449 = vmatprep.subr.mxu0 0.0
      %450 = vmatpush1.msra.mxu0 0.0
      %451 = vmatprep.subr.mxu0 0.0
      %452 = vmatpush1.msra.mxu0 0.0
      %453 = vmatprep.subr.mxu0 0.0
      %454 = vmatpush1.msra.mxu0 0.0
      %455 = vmatprep.subr.mxu0 0.0
      %456 = vmatpush1.msra.mxu0 0.0
      %457 = vmatprep.subr.mxu0 0.0
      %458 = vmatpush1.msra.mxu0 0.0
      %459 = vmatprep.subr.mxu0 0.0
      %460 = vmatpush1.msra.mxu0 0.0
      %461 = vmatprep.subr.mxu0 0.0
      %462 = vmatpush1.msra.mxu0 0.0
      %463 = vmatprep.subr.mxu0 0.0
      %464 = vmatpush1.msra.mxu0 0.0
      %465 = vmatprep.subr.mxu0 0.0
      %466 = vmatpush1.msra.mxu0 0.0
      %467 = vmatprep.subr.mxu0 0.0
      %468 = vmatpush1.msra.mxu0 0.0
      %469 = vmatprep.subr.mxu0 0.0
      %470 = vmatpush1.msra.mxu0 0.0
      %471 = vmatprep.subr.mxu0 0.0
      %472 = vmatpush1.msra.mxu0 0.0
      %473 = vmatprep.mubr.f32.mxu0 0.0
      %474 = vmatmul.mubr.f32.gmra.mrb[0].mxu0 %v369
      %v475 = vpop.f32.mrb[0].mxu0
      %v476 = vadd.f32 %v407, %v475
      %v477 = vpop.f32.mrb[0].mxu0
      %478 = vdwg.mxu0
      %vm479 = vcmp.ge.f32.partialorder %v476, 0.0
      %v480 = vmul.f32 %v476, 0.01
      %v481 = vsel %vm479, %v476, %v480
      %v482 = vadd.f32 %v193, %v481
      %483 = vst [vmem:[%s192] sm:$0xff] %v482
      %p484 = scmp.lt.s32.totalorder %s15, 1
      %s485 = scalar_select %p484, %s15, 1
      %s486 = smul.addr %s485, 8
      %s487 = scalar_lea.vmem %s4, %s486
      // Predicated region
      $region37: #{ff_layer.1} parent=35 // pred_check
        %p488 = pneg %p122
      $region38: #{ff_layer.1} parent=35 // pred_check_branch
        %490 = sbr.rel (%p488) target = $region40
      $region39: #{ff_layer.1} parent=35 // pred_region
        _
      $region40: #{ff_layer.1} parent=35 // pred_fallthru
        _
    $region36: #{ff_layer.1} parent=5 // pred_fallthru
      _
    %p491 = scmp.le.s32.totalorder 2, %s10
    // Predicated region
    $region41: #{ff_layer.1} parent=5 // pred_check
      %p492 = pneg %p491
    $region42: #{ff_layer.1} parent=5 // pred_check_branch
      %494 = sbr.rel (%p492) target = $region44
    $region43: #{ff_layer.1} parent=5 // pred_region
      %s495 = ssub.s32 %s10, 2
      // Predicated region
      $region45: #{ff_layer.1} parent=43 // pred_check
        %p496 = pneg %p128
      $region46: #{ff_layer.1} parent=43 // pred_check_branch
        %498 = sbr.rel (%p496) target = $region48
      $region47: #{ff_layer.1} parent=43 // pred_region
        %p499 = scmp.lt.s32.totalorder %s16, 1
        %s500 = scalar_select %p499, %s16, 1
        %s501 = smul.addr %s500, 8
        %s502 = scalar_lea.vmem %s4, %s501
      $region48: #{ff_layer.1} parent=43 // pred_fallthru
        _
    $region44: #{ff_layer.1} parent=5 // pred_fallthru
      _
  $region6: #{ff_layer.1} parent=0 // loop_footer
    %s14 = sadd.s32 1, %s10
  $region7: #{ff_layer.1} parent=0 // loop_footer_branch
    %9 = sbr.rel target = $region3
  $region8: #{ff_layer.1} parent=0 // loop_exit
    _

</llo_original>
